<compile_context>
chip_gen: v7x
topology: tpu7x:2x2x1
jax: 0.10.0
libtpu: 0.0.40
codegen_flags: <defaults>
</compile_context>

<pallas_src>
import jax
import jax.numpy as jnp
from jax.experimental import pallas as pl
from jax.experimental.pallas import tpu as pltpu

ACTION_SIZE = 3
STATE_SIZE = 96
HIDDEN = 128
HEAD_W = 8            # narrow fused head: pi lanes 0..2, v lane 3, rest zero
MAX_TILE_B = 2048     # rows per grid step; ~6 MiB VMEM incl. intermediates


def _round_up(n, m):
    return ((n + m - 1) // m) * m


def _choose_tile(B, max_tile=MAX_TILE_B):
    """Tile rows: multiple of 16, >=2 grid steps when possible (v7x megacore)."""
    if B <= 16:
        return B                       # block == full array dim -> always legal
    tb = _round_up(pl.cdiv(B, 2), 16)
    return min(tb, max_tile)


def actor_critic_kernel(x_ref, w1_ref, b1_ref, w2_ref, b2_ref,
                        wh_ref, bh_ref, out_ref):
    # x: (TB, 96) f32 -> bf16 in-register; weights bf16; biases f32; out (TB, 8) f32
    x = x_ref[...].astype(jnp.bfloat16)

    # d1 + relu  (bf16 MXU operands, f32 accumulation, f32 elementwise)
    h1 = jnp.dot(x, w1_ref[...], preferred_element_type=jnp.float32)
    h1 = jnp.maximum(h1 + b1_ref[...], 0.0)

    # d2 + relu
    h2 = jnp.dot(h1.astype(jnp.bfloat16), w2_ref[...],
                 preferred_element_type=jnp.float32)
    h2 = jnp.maximum(h2 + b2_ref[...], 0.0)

    # fused pi/v head: narrow (128 -> 8) matmul, keeps output lane-count small
    heads = jnp.dot(h2.astype(jnp.bfloat16), wh_ref[...],
                    preferred_element_type=jnp.float32)
    heads = heads + bh_ref[...]                                  # (TB, 8)

    # softmax over the pi lanes (0..ACTION_SIZE-1); other lanes masked to -inf
    # so exp() makes them exactly 0.  Reduction is over 8 lanes only.
    lane = jax.lax.broadcasted_iota(jnp.int32, heads.shape, dimension=1)
    is_pi = lane < ACTION_SIZE
    masked = jnp.where(is_pi, heads, -jnp.inf)
    m = jnp.max(masked, axis=-1, keepdims=True)
    e = jnp.exp(masked - m)                                      # 0 outside pi lanes
    denom = jnp.sum(e, axis=-1, keepdims=True)
    pi_lanes = e * pl.reciprocal(denom, approx=True)             # EUP vrcp slot

    v_lanes = jnp.where(lane == ACTION_SIZE, heads, 0.0)         # v in lane 3

    out_ref[...] = (pi_lanes + v_lanes).astype(out_ref.dtype)


def prepare_params(params):
    """One-time parameter prep: fuse heads, cast weights to bf16.

    Do this once at parameter creation, NOT per forward call.
    """
    (w1, b1, w2, b2, wpi, bpi, wv, bv) = params
    w_head = jnp.zeros((HIDDEN, HEAD_W), jnp.float32)
    w_head = w_head.at[:, :ACTION_SIZE].set(wpi)
    w_head = w_head.at[:, ACTION_SIZE:ACTION_SIZE + 1].set(wv)
    b_head = jnp.zeros((1, HEAD_W), jnp.float32)
    b_head = b_head.at[:, :ACTION_SIZE].set(bpi)
    b_head = b_head.at[:, ACTION_SIZE:ACTION_SIZE + 1].set(bv)
    return (w1.astype(jnp.bfloat16), b1,
            w2.astype(jnp.bfloat16), b2,
            w_head.astype(jnp.bfloat16), b_head)


def actor_critic(x, prepared, *, tile_b=MAX_TILE_B):
    """x: (B, 96) f32, prepared = prepare_params(params).
    Returns (pi (B,3) f32, v (B,1) f32)."""
    (w1_bf, b1, w2_bf, b2, wh_bf, b_head) = prepared
    B = x.shape[0]

    tb = _choose_tile(B, tile_b)
    grid = (pl.cdiv(B, tb),)           # partial last block clipped by Pallas

    out = pl.pallas_call(
        actor_critic_kernel,
        grid=grid,
        in_specs=[
            pl.BlockSpec((tb, STATE_SIZE), lambda i: (i, 0)),        # x tile (f32)
            pl.BlockSpec((STATE_SIZE, HIDDEN), lambda i: (0, 0)),    # w1 (resident)
            pl.BlockSpec((1, HIDDEN), lambda i: (0, 0)),             # b1
            pl.BlockSpec((HIDDEN, HIDDEN), lambda i: (0, 0)),        # w2
            pl.BlockSpec((1, HIDDEN), lambda i: (0, 0)),             # b2
            pl.BlockSpec((HIDDEN, HEAD_W), lambda i: (0, 0)),        # fused head W
            pl.BlockSpec((1, HEAD_W), lambda i: (0, 0)),             # fused head b
        ],
        out_specs=pl.BlockSpec((tb, HEAD_W), lambda i: (i, 0)),
        out_shape=jax.ShapeDtypeStruct((B, HEAD_W), jnp.float32),
        compiler_params=pltpu.CompilerParams(
            dimension_semantics=("parallel",)),                      # 2 TCs on v7x
    )(x, w1_bf, b1, w2_bf, b2, wh_bf, b_head)

    pi = out[:, :ACTION_SIZE]
    v = out[:, ACTION_SIZE:ACTION_SIZE + 1]
    return pi, v


def init_params(key):
    """Deterministic synthetic parameters. Weights are (in, out)."""
    ks = jax.random.split(key, 8)

    def lin(kw, kb, fan_in, fan_out):
        bound = 1.0 / jnp.sqrt(fan_in)
        w = jax.random.uniform(kw, (fan_in, fan_out), jnp.float32, -bound, bound)
        b = jax.random.uniform(kb, (1, fan_out), jnp.float32, -bound, bound)
        return w, b

    w1, b1 = lin(ks[0], ks[1], STATE_SIZE, HIDDEN)
    w2, b2 = lin(ks[2], ks[3], HIDDEN, HIDDEN)
    wpi, bpi = lin(ks[4], ks[5], HIDDEN, ACTION_SIZE)
    wv, bv = lin(ks[6], ks[7], HIDDEN, 1)
    return (w1, b1, w2, b2, wpi, bpi, wv, bv)


def reference(x, params):
    (w1, b1, w2, b2, wpi, bpi, wv, bv) = params
    h1 = jnp.maximum(x @ w1 + b1, 0.0)
    h2 = jnp.maximum(h1 @ w2 + b2, 0.0)
    logits = h2 @ wpi + bpi
    pi = jax.nn.softmax(logits, axis=-1)
    v = h2 @ wv + bv
    return pi, v


if __name__ == "__main__":
    key = jax.random.PRNGKey(0)
    kx, kp = jax.random.split(key)
    B = 8
    x = jax.random.normal(kx, (B, STATE_SIZE), jnp.float32)
    params = init_params(kp)
    prepared = prepare_params(params)          # one-time: fuse heads + bf16 cast

    pi, v = actor_critic(x, prepared)
    jax.block_until_ready((pi, v))

    pi_ref, v_ref = reference(x, params)
    assert pi.shape == (B, ACTION_SIZE) and v.shape == (B, 1)
    # Tolerances account for bf16 MXU operands (f32 accumulation) and the
    # approx (EUP) reciprocal in the softmax normalization.
    assert jnp.allclose(pi, pi_ref, atol=3e-2), "pi mismatch"
    assert jnp.allclose(v, v_ref, atol=3e-2), "v mismatch"
    assert jnp.allclose(jnp.sum(pi, axis=-1), 1.0, atol=5e-3), "softmax not normalized"
    print("KERNEL_OK")
</pallas_src>

<mosaic_0001>
module attributes {stable_mosaic.version = 11 : i64} {
  func.func @actor_critic_kernel(%arg0: i32, %arg1: memref<8x96xf32, #tpu.memory_space<vmem>>, %arg2: memref<96x128xbf16, #tpu.memory_space<vmem>>, %arg3: memref<1x128xf32, #tpu.memory_space<vmem>>, %arg4: memref<128x128xbf16, #tpu.memory_space<vmem>>, %arg5: memref<1x128xf32, #tpu.memory_space<vmem>>, %arg6: memref<128x8xbf16, #tpu.memory_space<vmem>>, %arg7: memref<1x8xf32, #tpu.memory_space<vmem>>, %arg8: memref<8x8xf32, #tpu.memory_space<vmem>>) attributes {dimension_semantics = [#tpu.dimension_semantics<parallel>], iteration_bounds = array<i64: 1>, scalar_prefetch = 0 : i64, scratch_operands = 0 : i64, tpu.core_type = #tpu.core_type<tc>, window_params = [{transform_indices = @transform_0, window_bounds = array<i64: 8, 96>}, {pipeline_mode = #tpu.pipeline_mode<synchronous>, transform_indices = @transform_1, window_bounds = array<i64: 96, 128>}, {pipeline_mode = #tpu.pipeline_mode<synchronous>, transform_indices = @transform_2, window_bounds = array<i64: 1, 128>}, {pipeline_mode = #tpu.pipeline_mode<synchronous>, transform_indices = @transform_3, window_bounds = array<i64: 128, 128>}, {pipeline_mode = #tpu.pipeline_mode<synchronous>, transform_indices = @transform_4, window_bounds = array<i64: 1, 128>}, {pipeline_mode = #tpu.pipeline_mode<synchronous>, transform_indices = @transform_5, window_bounds = array<i64: 128, 8>}, {pipeline_mode = #tpu.pipeline_mode<synchronous>, transform_indices = @transform_6, window_bounds = array<i64: 1, 8>}, {transform_indices = @transform_7, window_bounds = array<i64: 8, 8>}]} {
    %c0 = arith.constant 0 : index
    %c0_0 = arith.constant 0 : index
    %0 = vector.load %arg1[%c0, %c0_0] : memref<8x96xf32, #tpu.memory_space<vmem>>, vector<8x96xf32>
    %1 = arith.truncf %0 : vector<8x96xf32> to vector<8x96xbf16>
    %c0_1 = arith.constant 0 : index
    %c0_2 = arith.constant 0 : index
    %2 = vector.load %arg2[%c0_1, %c0_2] : memref<96x128xbf16, #tpu.memory_space<vmem>>, vector<96x128xbf16>
    %cst = arith.constant dense<0.000000e+00> : vector<8x128xf32>
    %3 = tpu.matmul %1, %2, %cst {dimension_numbers = #tpu.dot_dimension_numbers<[1], [0], [0], [1], [0, 0, 1, 1], [], []>} : vector<8x96xbf16>, vector<96x128xbf16>, vector<8x128xf32> -> vector<8x128xf32>
    %c0_3 = arith.constant 0 : index
    %c0_4 = arith.constant 0 : index
    %4 = vector.load %arg3[%c0_3, %c0_4] : memref<1x128xf32, #tpu.memory_space<vmem>>, vector<1x128xf32>
    %5 = vector.broadcast %4 : vector<1x128xf32> to vector<8x128xf32>
    %6 = arith.addf %3, %5 : vector<8x128xf32>
    %cst_5 = arith.constant 0.000000e+00 : f32
    %7 = vector.broadcast %cst_5 : f32 to vector<8x128xf32>
    %8 = arith.maximumf %6, %7 : vector<8x128xf32>
    %9 = arith.truncf %8 : vector<8x128xf32> to vector<8x128xbf16>
    %c0_6 = arith.constant 0 : index
    %c0_7 = arith.constant 0 : index
    %10 = vector.load %arg4[%c0_6, %c0_7] : memref<128x128xbf16, #tpu.memory_space<vmem>>, vector<128x128xbf16>
    %cst_8 = arith.constant dense<0.000000e+00> : vector<8x128xf32>
    %11 = tpu.matmul %9, %10, %cst_8 {dimension_numbers = #tpu.dot_dimension_numbers<[1], [0], [0], [1], [0, 0, 1, 1], [], []>} : vector<8x128xbf16>, vector<128x128xbf16>, vector<8x128xf32> -> vector<8x128xf32>
    %c0_9 = arith.constant 0 : index
    %c0_10 = arith.constant 0 : index
    %12 = vector.load %arg5[%c0_9, %c0_10] : memref<1x128xf32, #tpu.memory_space<vmem>>, vector<1x128xf32>
    %13 = vector.broadcast %12 : vector<1x128xf32> to vector<8x128xf32>
    %14 = arith.addf %11, %13 : vector<8x128xf32>
    %cst_11 = arith.constant 0.000000e+00 : f32
    %15 = vector.broadcast %cst_11 : f32 to vector<8x128xf32>
    %16 = arith.maximumf %14, %15 : vector<8x128xf32>
    %17 = arith.truncf %16 : vector<8x128xf32> to vector<8x128xbf16>
    %c0_12 = arith.constant 0 : index
    %c0_13 = arith.constant 0 : index
    %18 = vector.load %arg6[%c0_12, %c0_13] : memref<128x8xbf16, #tpu.memory_space<vmem>>, vector<128x8xbf16>
    %cst_14 = arith.constant dense<0.000000e+00> : vector<8x8xf32>
    %19 = tpu.matmul %17, %18, %cst_14 {dimension_numbers = #tpu.dot_dimension_numbers<[1], [0], [0], [1], [0, 0, 1, 1], [], []>} : vector<8x128xbf16>, vector<128x8xbf16>, vector<8x8xf32> -> vector<8x8xf32>
    %c0_15 = arith.constant 0 : index
    %c0_16 = arith.constant 0 : index
    %20 = vector.load %arg7[%c0_15, %c0_16] : memref<1x8xf32, #tpu.memory_space<vmem>>, vector<1x8xf32>
    %21 = vector.broadcast %20 : vector<1x8xf32> to vector<8x8xf32>
    %22 = arith.addf %19, %21 : vector<8x8xf32>
    %23 = tpu.iota {dimensions = array<i32: 1>} : vector<8x8xi32>
    %c3_i32 = arith.constant 3 : i32
    %24 = vector.broadcast %c3_i32 : i32 to vector<8x8xi32>
    %25 = arith.cmpi slt, %23, %24 : vector<8x8xi32>
    %cst_17 = arith.constant 0xFF800000 : f32
    %26 = vector.broadcast %cst_17 : f32 to vector<8x8xf32>
    %27 = arith.select %25, %22, %26 : vector<8x8xi1>, vector<8x8xf32>
    %cst_18 = arith.constant dense<0xFF800000> : vector<8xf32>
    %28 = vector.multi_reduction <maximumf>, %27, %cst_18 [1] : vector<8x8xf32> to vector<8xf32>
    %29 = vector.shape_cast %28 : vector<8xf32> to vector<8x1xf32>
    %30 = vector.broadcast %29 : vector<8x1xf32> to vector<8x8xf32>
    %31 = arith.subf %27, %30 : vector<8x8xf32>
    %32 = math.exp %31 : vector<8x8xf32>
    %cst_19 = arith.constant dense<0.000000e+00> : vector<8xf32>
    %33 = vector.multi_reduction <add>, %32, %cst_19 [1] : vector<8x8xf32> to vector<8xf32>
    %34 = vector.shape_cast %33 : vector<8xf32> to vector<8x1xf32>
    %35 = tpu.reciprocal %34 {approx = true} : vector<8x1xf32> -> vector<8x1xf32>
    %36 = vector.broadcast %35 : vector<8x1xf32> to vector<8x8xf32>
    %37 = arith.mulf %32, %36 : vector<8x8xf32>
    %c3_i32_20 = arith.constant 3 : i32
    %38 = vector.broadcast %c3_i32_20 : i32 to vector<8x8xi32>
    %39 = arith.cmpi eq, %23, %38 : vector<8x8xi32>
    %cst_21 = arith.constant 0.000000e+00 : f32
    %40 = vector.broadcast %cst_21 : f32 to vector<8x8xf32>
    %41 = arith.select %39, %22, %40 : vector<8x8xi1>, vector<8x8xf32>
    %42 = arith.addf %37, %41 : vector<8x8xf32>
    %c0_22 = arith.constant 0 : index
    %c0_23 = arith.constant 0 : index
    %43 = vector.load %arg8[%c0_22, %c0_23] : memref<8x8xf32, #tpu.memory_space<vmem>>, vector<8x8xf32>
    tpu.vector_store %arg8[%c0_22, %c0_23], %42 {strides = array<i32>} : memref<8x8xf32, #tpu.memory_space<vmem>>, vector<8x8xf32>,
    return
  }
  func.func @transform_0(%arg0: i32) -> (i32, i32) {
    %c0_i32 = arith.constant 0 : i32
    %c0_i32_0 = arith.constant 0 : i32
    return %arg0, %c0_i32 : i32, i32
  }
  func.func @transform_1(%arg0: i32) -> (i32, i32) {
    %c0_i32 = arith.constant 0 : i32
    %c0_i32_0 = arith.constant 0 : i32
    %c0_i32_1 = arith.constant 0 : i32
    return %c0_i32, %c0_i32_0 : i32, i32
  }
  func.func @transform_2(%arg0: i32) -> (i32, i32) {
    %c0_i32 = arith.constant 0 : i32
    %c0_i32_0 = arith.constant 0 : i32
    %c0_i32_1 = arith.constant 0 : i32
    return %c0_i32, %c0_i32_0 : i32, i32
  }
  func.func @transform_3(%arg0: i32) -> (i32, i32) {
    %c0_i32 = arith.constant 0 : i32
    %c0_i32_0 = arith.constant 0 : i32
    %c0_i32_1 = arith.constant 0 : i32
    return %c0_i32, %c0_i32_0 : i32, i32
  }
  func.func @transform_4(%arg0: i32) -> (i32, i32) {
    %c0_i32 = arith.constant 0 : i32
    %c0_i32_0 = arith.constant 0 : i32
    %c0_i32_1 = arith.constant 0 : i32
    return %c0_i32, %c0_i32_0 : i32, i32
  }
  func.func @transform_5(%arg0: i32) -> (i32, i32) {
    %c0_i32 = arith.constant 0 : i32
    %c0_i32_0 = arith.constant 0 : i32
    %c0_i32_1 = arith.constant 0 : i32
    return %c0_i32, %c0_i32_0 : i32, i32
  }
  func.func @transform_6(%arg0: i32) -> (i32, i32) {
    %c0_i32 = arith.constant 0 : i32
    %c0_i32_0 = arith.constant 0 : i32
    %c0_i32_1 = arith.constant 0 : i32
    return %c0_i32, %c0_i32_0 : i32, i32
  }
  func.func @transform_7(%arg0: i32) -> (i32, i32) {
    %c0_i32 = arith.constant 0 : i32
    %c0_i32_0 = arith.constant 0 : i32
    return %arg0, %c0_i32 : i32, i32
  }
}

</mosaic_0001>

<llo_original>
// kernel: tpu_custom_call.1
$region0: #{tpu_custom_call.1}
  #allocation0 [shape = 'u32[]', space=smem, size = 0x4, offset = 0x4, fixed_abs, tag = 'smem constant byte address 0x4 - core index']
  #allocation1 [shape = 'u32[144,128]{1,0:T(1,128)}', space=vmem, size = 0x12000, scoped, tag = 'internal scratch']
  %s0 = inlined_call_operand.vmem [shape: f32[8,96], index: 0, kind: input, shape index: {}]
  %s1 = inlined_call_operand.hbm [shape: bf16[96,128], index: 1, kind: input, shape index: {}]
  %s2 = inlined_call_operand.vmem [shape: f32[1,128], index: 2, kind: input, shape index: {}]
  %s3 = inlined_call_operand.vmem [shape: bf16[128,128], index: 3, kind: input, shape index: {}]
  %s4 = inlined_call_operand.vmem [shape: f32[1,128], index: 4, kind: input, shape index: {}]
  %s5 = inlined_call_operand.vmem [shape: bf16[128,8], index: 5, kind: input, shape index: {}]
  %s6 = inlined_call_operand.vmem [shape: f32[1,8], index: 6, kind: input, shape index: {}]
  %s7 = inlined_call_operand.hbm [shape: f32[8,8], index: 7, kind: output, shape index: {}]
  %s8 = sld [smem:[#allocation0]]
  $region42: #{tpu_custom_call.1} parent=0
    _
  %s10 = ssub.s32 1, %s8
  %s11 = scalar_select 0, %s10, %s8
  $region1: #{tpu_custom_call.1} parent=0
    #allocation2 [shape = 'u8[24576]{0}', space=vmem, size = 0x6000, scoped, tag = 'input window, operand 1, single buffered']
    #allocation3 [shape = 's32[1]{0}', space=sflag, size = 0x4, scoped, tag = 'scoped memory for tpu_custom_call.1']
    #allocation4 [shape = 's32[1]{0}', space=sflag, size = 0x4, scoped, tag = 'scoped memory for tpu_custom_call.1']
    #allocation5 [shape = 'u8[4096]{0}', space=vmem, size = 0x1000, scoped, tag = 'output window, operand 0, single buffered']
    %12 = vsyncpa [#allocation3], 0
    %13 = vsyncpa [#allocation4], 0
    // Predicated region
    $region2: #{tpu_custom_call.1} parent=1 // pred_check
      _
    $region3: #{tpu_custom_call.1} parent=1 // pred_check_branch
      %15 = sbr.rel (0) target = $region5
    $region4: #{tpu_custom_call.1} parent=1 // pred_region
      _
    $region5: #{tpu_custom_call.1} parent=1 // pred_fallthru
      _
    // Predicated region
    $region6: #{tpu_custom_call.1} parent=1 // pred_check
      _
    $region7: #{tpu_custom_call.1} parent=1 // pred_check_branch
      %17 = sbr.rel (0) target = $region9
    $region8: #{tpu_custom_call.1} parent=1 // pred_region
      %s19 = ssub.s32 768, 768
      %20 = vsyncadd [#allocation3], %s19
      %s21 = sshll.u32 [#allocation2], 4
      %s22 = int_to_ptr.vmem [resolvable:$true] %s21
      %27 = dma.hbm_to_vmem [thread:$0]  %s1, 768, %s22, [#allocation3], 64, 64, 4
    $region9: #{tpu_custom_call.1} parent=1 // pred_fallthru
      _
    // Predicated region
    $region10: #{tpu_custom_call.1} parent=1 // pred_check
      _
    $region11: #{tpu_custom_call.1} parent=1 // pred_check_branch
      %29 = sbr.rel (0) target = $region13
    $region12: #{tpu_custom_call.1} parent=1 // pred_region
      _
    $region13: #{tpu_custom_call.1} parent=1 // pred_fallthru
      _
    // Predicated region
    $region14: #{tpu_custom_call.1} parent=1 // pred_check
      _
    $region15: #{tpu_custom_call.1} parent=1 // pred_check_branch
      %31 = sbr.rel (0) target = $region17
    $region16: #{tpu_custom_call.1} parent=1 // pred_region
      _
    $region17: #{tpu_custom_call.1} parent=1 // pred_fallthru
      _
    // Predicated region
    $region18: #{tpu_custom_call.1} parent=1 // pred_check
      _
    $region19: #{tpu_custom_call.1} parent=1 // pred_check_branch
      %33 = sbr.rel (0) target = $region21
    $region20: #{tpu_custom_call.1} parent=1 // pred_region
      _
    $region21: #{tpu_custom_call.1} parent=1 // pred_fallthru
      _
    // Predicated region
    $region22: #{tpu_custom_call.1} parent=1 // pred_check
      _
    $region23: #{tpu_custom_call.1} parent=1 // pred_check_branch
      %35 = sbr.rel (0) target = $region25
    $region24: #{tpu_custom_call.1} parent=1 // pred_region
      _
    $region25: #{tpu_custom_call.1} parent=1 // pred_fallthru
      _
    // Predicated region
    $region26: #{tpu_custom_call.1} parent=1 // pred_check
      _
    $region27: #{tpu_custom_call.1} parent=1 // pred_check_branch
      %37 = sbr.rel (0) target = $region29
    $region28: #{tpu_custom_call.1} parent=1 // pred_region
      _
    $region29: #{tpu_custom_call.1} parent=1 // pred_fallthru
      _
    // Predicated region
    $region30: #{tpu_custom_call.1} parent=1 // pred_check
      _
    $region31: #{tpu_custom_call.1} parent=1 // pred_check_branch
      %39 = sbr.rel (0) target = $region33
    $region32: #{tpu_custom_call.1} parent=1 // pred_region
      %40 = dma.done [#allocation3], 768
    $region33: #{tpu_custom_call.1} parent=1 // pred_fallthru
      _
    %v42 = vld [vmem:[%s0] sm:$0xff]
    %v43 = vpack.c.bf16 %v42, %v42
    %v44 = vld [vmem:[#allocation2] sm:$0xf]
    %v45 = vld [vmem:[#allocation2 + $0x4] sm:$0xf]
    %v46 = vld [vmem:[#allocation2 + $0x8] sm:$0xf]
    %v47 = vld [vmem:[#allocation2 + $0xc] sm:$0xf]
    %v48 = vld [vmem:[#allocation2 + $0x10] sm:$0xf]
    %v49 = vld [vmem:[#allocation2 + $0x14] sm:$0xf]
    %v50 = vld [vmem:[#allocation2 + $0x18] sm:$0xf]
    %v51 = vld [vmem:[#allocation2 + $0x1c] sm:$0xf]
    %v52 = vld [vmem:[#allocation2 + $0x20] sm:$0xf]
    %v53 = vld [vmem:[#allocation2 + $0x24] sm:$0xf]
    %v54 = vld [vmem:[#allocation2 + $0x28] sm:$0xf]
    %v55 = vld [vmem:[#allocation2 + $0x2c] sm:$0xf]
    %v56 = vld [vmem:[%s2] sm:$0x1]
    %v58 = vlaneseq
    %v59 = vshrl.u32 %v58, 7
    %v60 = vsub.s32 0, %v59
    %v61 = vrot.slane %v56, %v60
    %v75 = vunpack.c.l.b16 %v44
    %v76 = vunpack.c.l.b16 %v45
    %v77 = vunpack.c.l.b16 %v46
    %v78 = vunpack.c.l.b16 %v47
    %v79 = vunpack.c.l.b16 %v48
    %v80 = vunpack.c.l.b16 %v49
    %v81 = vunpack.c.l.b16 %v50
    %v82 = vunpack.c.l.b16 %v51
    %v83 = vunpack.c.l.b16 %v52
    %v84 = vunpack.c.l.b16 %v53
    %v85 = vunpack.c.l.b16 %v54
    %v86 = vunpack.c.l.b16 %v55
    %v87 = vpack.c.b16 %v76, %v75
    %v88 = vpack.c.b16 %v78, %v77
    %v89 = vpack.c.b16 %v80, %v79
    %v90 = vpack.c.b16 %v82, %v81
    %v91 = vpack.c.b16 %v84, %v83
    %v92 = vpack.c.b16 %v86, %v85
    %vm99 = vcmask 785408
    %v101 = vsel %vm99, %v43, 0
    %103 = vmatprep.subr.bf16.mxu0 0
    %104 = vmatpush1.bf16.msra.mxu0 %v87
    %105 = vmatprep.subr.bf16.mxu0 0
    %106 = vmatpush1.bf16.msra.mxu0 %v88
    %107 = vmatprep.subr.bf16.mxu0 0
    %108 = vmatpush1.bf16.msra.mxu0 %v89
    %109 = vmatprep.subr.bf16.mxu0 0
    %110 = vmatpush1.bf16.msra.mxu0 %v90
    %111 = vmatprep.subr.bf16.mxu0 0
    %112 = vmatpush1.bf16.msra.mxu0 %v91
    %113 = vmatprep.subr.bf16.mxu0 0
    %114 = vmatpush1.bf16.msra.mxu0 %v92
    %115 = vmatprep.subr.bf16.mxu0 0
    %116 = vmatpush1.bf16.msra.mxu0 0
    %117 = vmatprep.subr.bf16.mxu0 0
    %118 = vmatpush1.bf16.msra.mxu0 0
    %119 = vmatprep.subr.bf16.mxu0 0
    %120 = vmatpush1.bf16.msra.mxu0 0
    %121 = vmatprep.subr.bf16.mxu0 0
    %122 = vmatpush1.bf16.msra.mxu0 0
    %123 = vmatprep.subr.bf16.mxu0 0
    %124 = vmatpush1.bf16.msra.mxu0 0
    %125 = vmatprep.subr.bf16.mxu0 0
    %126 = vmatpush1.bf16.msra.mxu0 0
    %127 = vmatprep.subr.bf16.mxu0 0
    %128 = vmatpush1.bf16.msra.mxu0 0
    %129 = vmatprep.subr.bf16.mxu0 0
    %130 = vmatpush1.bf16.msra.mxu0 0
    %131 = vmatprep.subr.bf16.mxu0 0
    %132 = vmatpush1.bf16.msra.mxu0 0
    %133 = vmatprep.subr.bf16.mxu0 0
    %134 = vmatpush1.bf16.msra.mxu0 0
    %135 = vmatprep.mubr.bf16.mxu0 0
    %136 = vmatmul.mubr.bf16.gmra.mrb[0].mxu0 %v101
    %v137 = vpop.f32.mrb[0].mxu0
    %v138 = vadd.f32 %v61, %v137
    %v139 = vpop.f32.mrb[0].mxu0
    %v140 = vpop.f32.mrb[0].mxu0
    %v141 = vpop.f32.mrb[0].mxu0
    %142 = vdwg.mxu0
    %v143 = vmax.f32 %v138, 0.0
    %v144 = vpack.c.bf16 %v143, %v143
    %v145 = vld [vmem:[%s3] sm:$0xf]
    %v146 = vld [vmem:[%s3 + $0x4] sm:$0xf]
    %v147 = vld [vmem:[%s3 + $0x8] sm:$0xf]
    %v148 = vld [vmem:[%s3 + $0xc] sm:$0xf]
    %v149 = vld [vmem:[%s3 + $0x10] sm:$0xf]
    %v150 = vld [vmem:[%s3 + $0x14] sm:$0xf]
    %v151 = vld [vmem:[%s3 + $0x18] sm:$0xf]
    %v152 = vld [vmem:[%s3 + $0x1c] sm:$0xf]
    %v153 = vld [vmem:[%s3 + $0x20] sm:$0xf]
    %v154 = vld [vmem:[%s3 + $0x24] sm:$0xf]
    %v155 = vld [vmem:[%s3 + $0x28] sm:$0xf]
    %v156 = vld [vmem:[%s3 + $0x2c] sm:$0xf]
    %v157 = vld [vmem:[%s3 + $0x30] sm:$0xf]
    %v158 = vld [vmem:[%s3 + $0x34] sm:$0xf]
    %v159 = vld [vmem:[%s3 + $0x38] sm:$0xf]
    %v160 = vld [vmem:[%s3 + $0x3c] sm:$0xf]
    %v161 = vld [vmem:[%s4] sm:$0x1]
    %v163 = vlaneseq
    %v164 = vshrl.u32 %v163, 7
    %v165 = vsub.s32 0, %v164
    %v166 = vrot.slane %v161, %v165
    %v184 = vunpack.c.l.b16 %v145
    %v185 = vunpack.c.l.b16 %v146
    %v186 = vunpack.c.l.b16 %v147
    %v187 = vunpack.c.l.b16 %v148
    %v188 = vunpack.c.l.b16 %v149
    %v189 = vunpack.c.l.b16 %v150
    %v190 = vunpack.c.l.b16 %v151
    %v191 = vunpack.c.l.b16 %v152
    %v192 = vunpack.c.l.b16 %v153
    %v193 = vunpack.c.l.b16 %v154
    %v194 = vunpack.c.l.b16 %v155
    %v195 = vunpack.c.l.b16 %v156
    %v196 = vunpack.c.l.b16 %v157
    %v197 = vunpack.c.l.b16 %v158
    %v198 = vunpack.c.l.b16 %v159
    %v199 = vunpack.c.l.b16 %v160
    %v200 = vpack.c.b16 %v185, %v184
    %v201 = vpack.c.b16 %v187, %v186
    %v202 = vpack.c.b16 %v189, %v188
    %v203 = vpack.c.b16 %v191, %v190
    %v204 = vpack.c.b16 %v193, %v192
    %v205 = vpack.c.b16 %v195, %v194
    %v206 = vpack.c.b16 %v197, %v196
    %v207 = vpack.c.b16 %v199, %v198
    %216 = vmatprep.subr.bf16.mxu0 0
    %217 = vmatpush1.bf16.msra.mxu0 %v200
    %218 = vmatprep.subr.bf16.mxu0 0
    %219 = vmatpush1.bf16.msra.mxu0 %v201
    %220 = vmatprep.subr.bf16.mxu0 0
    %221 = vmatpush1.bf16.msra.mxu0 %v202
    %222 = vmatprep.subr.bf16.mxu0 0
    %223 = vmatpush1.bf16.msra.mxu0 %v203
    %224 = vmatprep.subr.bf16.mxu0 0
    %225 = vmatpush1.bf16.msra.mxu0 %v204
    %226 = vmatprep.subr.bf16.mxu0 0
    %227 = vmatpush1.bf16.msra.mxu0 %v205
    %228 = vmatprep.subr.bf16.mxu0 0
    %229 = vmatpush1.bf16.msra.mxu0 %v206
    %230 = vmatprep.subr.bf16.mxu0 0
    %231 = vmatpush1.bf16.msra.mxu0 %v207
    %232 = vmatprep.subr.bf16.mxu0 0
    %233 = vmatpush1.bf16.msra.mxu0 0
    %234 = vmatprep.subr.bf16.mxu0 0
    %235 = vmatpush1.bf16.msra.mxu0 0
    %236 = vmatprep.subr.bf16.mxu0 0
    %237 = vmatpush1.bf16.msra.mxu0 0
    %238 = vmatprep.subr.bf16.mxu0 0
    %239 = vmatpush1.bf16.msra.mxu0 0
    %240 = vmatprep.subr.bf16.mxu0 0
    %241 = vmatpush1.bf16.msra.mxu0 0
    %242 = vmatprep.subr.bf16.mxu0 0
    %243 = vmatpush1.bf16.msra.mxu0 0
    %244 = vmatprep.subr.bf16.mxu0 0
    %245 = vmatpush1.bf16.msra.mxu0 0
    %246 = vmatprep.subr.bf16.mxu0 0
    %247 = vmatpush1.bf16.msra.mxu0 0
    %248 = vmatprep.mubr.bf16.mxu0 0
    %249 = vmatmul.mubr.bf16.gmra.mrb[0].mxu0 %v144
    %v250 = vpop.f32.mrb[0].mxu0
    %v251 = vadd.f32 %v166, %v250
    %v252 = vpop.f32.mrb[0].mxu0
    %v253 = vpop.f32.mrb[0].mxu0
    %v254 = vpop.f32.mrb[0].mxu0
    %255 = vdwg.mxu0
    %v256 = vmax.f32 %v251, 0.0
    %v257 = vpack.c.bf16 %v256, %v256
    %v258 = vld [vmem:[%s5] sm:$0xf]
    %v259 = vld [vmem:[%s5 + $0x4] sm:$0xf]
    %v260 = vld [vmem:[%s5 + $0x8] sm:$0xf]
    %v261 = vld [vmem:[%s5 + $0xc] sm:$0xf]
    %v262 = vld [vmem:[%s5 + $0x10] sm:$0xf]
    %v263 = vld [vmem:[%s5 + $0x14] sm:$0xf]
    %v264 = vld [vmem:[%s5 + $0x18] sm:$0xf]
    %v265 = vld [vmem:[%s5 + $0x1c] sm:$0xf]
    %v266 = vld [vmem:[%s5 + $0x20] sm:$0xf]
    %v267 = vld [vmem:[%s5 + $0x24] sm:$0xf]
    %v268 = vld [vmem:[%s5 + $0x28] sm:$0xf]
    %v269 = vld [vmem:[%s5 + $0x2c] sm:$0xf]
    %v270 = vld [vmem:[%s5 + $0x30] sm:$0xf]
    %v271 = vld [vmem:[%s5 + $0x34] sm:$0xf]
    %v272 = vld [vmem:[%s5 + $0x38] sm:$0xf]
    %v273 = vld [vmem:[%s5 + $0x3c] sm:$0xf]
    %v274 = vld [vmem:[%s6] sm:$0x1]
    %v276 = vlaneseq
    %v277 = vshrl.u32 %v276, 7
    %v278 = vsub.s32 0, %v277
    %v279 = vrot.slane %v274, %v278
    %v297 = vunpack.c.l.b16 %v258
    %v298 = vunpack.c.l.b16 %v259
    %v299 = vunpack.c.l.b16 %v260
    %v300 = vunpack.c.l.b16 %v261
    %v301 = vunpack.c.l.b16 %v262
    %v302 = vunpack.c.l.b16 %v263
    %v303 = vunpack.c.l.b16 %v264
    %v304 = vunpack.c.l.b16 %v265
    %v305 = vunpack.c.l.b16 %v266
    %v306 = vunpack.c.l.b16 %v267
    %v307 = vunpack.c.l.b16 %v268
    %v308 = vunpack.c.l.b16 %v269
    %v309 = vunpack.c.l.b16 %v270
    %v310 = vunpack.c.l.b16 %v271
    %v311 = vunpack.c.l.b16 %v272
    %v312 = vunpack.c.l.b16 %v273
    %v313 = vpack.c.b16 %v298, %v297
    %v314 = vpack.c.b16 %v300, %v299
    %v315 = vpack.c.b16 %v302, %v301
    %v316 = vpack.c.b16 %v304, %v303
    %v317 = vpack.c.b16 %v306, %v305
    %v318 = vpack.c.b16 %v308, %v307
    %v319 = vpack.c.b16 %v310, %v309
    %v320 = vpack.c.b16 %v312, %v311
    %329 = vmatprep.subr.bf16.mxu0 0
    %330 = vmatpush1.bf16.msra.mxu0 %v313
    %331 = vmatprep.subr.bf16.mxu0 0
    %332 = vmatpush1.bf16.msra.mxu0 %v314
    %333 = vmatprep.subr.bf16.mxu0 0
    %334 = vmatpush1.bf16.msra.mxu0 %v315
    %335 = vmatprep.subr.bf16.mxu0 0
    %336 = vmatpush1.bf16.msra.mxu0 %v316
    %337 = vmatprep.subr.bf16.mxu0 0
    %338 = vmatpush1.bf16.msra.mxu0 %v317
    %339 = vmatprep.subr.bf16.mxu0 0
    %340 = vmatpush1.bf16.msra.mxu0 %v318
    %341 = vmatprep.subr.bf16.mxu0 0
    %342 = vmatpush1.bf16.msra.mxu0 %v319
    %343 = vmatprep.subr.bf16.mxu0 0
    %344 = vmatpush1.bf16.msra.mxu0 %v320
    %345 = vmatprep.subr.bf16.mxu0 0
    %346 = vmatpush1.bf16.msra.mxu0 0
    %347 = vmatprep.subr.bf16.mxu0 0
    %348 = vmatpush1.bf16.msra.mxu0 0
    %349 = vmatprep.subr.bf16.mxu0 0
    %350 = vmatpush1.bf16.msra.mxu0 0
    %351 = vmatprep.subr.bf16.mxu0 0
    %352 = vmatpush1.bf16.msra.mxu0 0
    %353 = vmatprep.subr.bf16.mxu0 0
    %354 = vmatpush1.bf16.msra.mxu0 0
    %355 = vmatprep.subr.bf16.mxu0 0
    %356 = vmatpush1.bf16.msra.mxu0 0
    %357 = vmatprep.subr.bf16.mxu0 0
    %358 = vmatpush1.bf16.msra.mxu0 0
    %359 = vmatprep.subr.bf16.mxu0 0
    %360 = vmatpush1.bf16.msra.mxu0 0
    %361 = vmatprep.mubr.bf16.mxu0 0
    %362 = vmatmul.mubr.bf16.gmra.mrb[0].mxu0 %v257
    %v363 = vpop.f32.mrb[0].mxu0
    %v364 = vadd.f32 %v279, %v363
    %v365 = vpop.f32.mrb[0].mxu0
    %v366 = vpop.f32.mrb[0].mxu0
    %v367 = vpop.f32.mrb[0].mxu0
    %368 = vdwg.mxu0
    %v369 = vlaneseq
    %v370 = vand.u32 %v369, 127
    %vm371 = vcmp.lt.s32.totalorder %v370, 3
    %v372 = vsel %vm371, %v364, -inf
    %vm373 = vcmask 64512
    %v374 = vsel %vm373, %v372, -inf
    %375 = vmax.xlane.f32.xlu0 %v374
    %v376 = vpop.xlane.xlu0 %375
    %v377 = vsub.f32 %v372, %v376
    %v378 = vmul.f32 %v377, 1.442695
    %v379 = vpow.pop %v378
    %v380 = vsel %vm373, %v379, 0.0
    %381 = vadd.xlane.f32.xlu0 %v380
    %v382 = vpop.xlane.xlu0 %381
    %v383 = vrcp.pop %v382
    %v384 = vmul.f32 %v379, %v383
    %vm385 = vcmp.eq.s32.totalorder %v370, 3
    %v386 = vsel %vm385, %v364, 0.0
    %v387 = vadd.f32 %v384, %v386
    %388 = vst.msk [vmem:[#allocation5] sm:$0xff] %vm373, %v387
    // Predicated region
    $region34: #{tpu_custom_call.1} parent=1 // pred_check
      _
    $region35: #{tpu_custom_call.1} parent=1 // pred_check_branch
      %390 = sbr.rel (0) target = $region37
    $region36: #{tpu_custom_call.1} parent=1 // pred_region
      %s392 = ssub.s32 128, 128
      %393 = vsyncadd [#allocation4], %s392
      %s395 = sshll.u32 [#allocation5], 4
      %s396 = int_to_ptr.vmem [resolvable:$true] %s395
      %398 = dma.vmem_to_hbm [thread:$0]  %s396, 128, %s7, [#allocation4]
    $region37: #{tpu_custom_call.1} parent=1 // pred_fallthru
      _
    // Predicated region
    $region38: #{tpu_custom_call.1} parent=1 // pred_check
      _
    $region39: #{tpu_custom_call.1} parent=1 // pred_check_branch
      %400 = sbr.rel (0) target = $region41
    $region40: #{tpu_custom_call.1} parent=1 // pred_region
      %401 = dma.done [#allocation4], 128
    $region41: #{tpu_custom_call.1} parent=1 // pred_fallthru
      _
    %402 = vsyncpa [#allocation3], 1
    %403 = vsyncpa [#allocation4], 1

</llo_original>
